<compile_context>
chip_gen: v6e
topology: v6e:2x2x1
jax: 0.10.0
libtpu: 0.0.40
codegen_flags: <defaults>
</compile_context>

<pallas_src>
import functools

import jax
import jax.numpy as jnp
from jax import lax
from jax.experimental import pallas as pl
from jax.experimental.pallas import tpu as pltpu


def _round_up(x, m):
    return ((x + m - 1) // m) * m


def _pairwise_ranking_loss_kernel(a1_ref, a2_ref, is_ref, si_ref, out_ref, acc_ref,
                                  *, margin, m, n, tm, tn, masked):
    j = pl.program_id(1)

    # New row tile -> reset the accumulator.
    @pl.when(j == 0)
    def _init():
        acc_ref[...] = jnp.zeros_like(acc_ref)

    # Upcast inside the kernel (inputs stream over HBM in their native dtype).
    a1 = a1_ref[...].astype(jnp.float32)
    a2 = a2_ref[...].astype(jnp.float32)
    isc = is_ref[...].astype(jnp.float32)
    sic = si_ref[...].astype(jnp.float32)

    hinge = (jnp.maximum(margin - a1 + isc, 0.0)
             + jnp.maximum(margin - a2 + sic, 0.0))

    if masked:
        # Mask out-of-bounds rows/cols of edge tiles (OOB block data is unspecified).
        i = pl.program_id(0)
        rows = lax.broadcasted_iota(jnp.int32, (tm, tn), 0) + i * tm
        cols = lax.broadcasted_iota(jnp.int32, (tm, tn), 1) + j * tn
        hinge = jnp.where((rows < m) & (cols < n), hinge, 0.0)

    # Scalar partial sum broadcast-added into a vreg-shaped accumulator
    # (keeps the output store to a single epilogue per row tile).
    acc_ref[...] += jnp.sum(hinge)

    # Last column tile -> flush this row tile's partial sum (lane-dense (8,128) store).
    @pl.when(j == pl.num_programs(1) - 1)
    def _finalize():
        out_ref[0, :, :] = acc_ref[...]


def pairwise_ranking_loss(anchor1, anchor2, img_sentc, sent_imgc, margin,
                          *, tm_max=512, tn_max=1024):
    """Scalar float32 loss, matching the PyTorch module semantics."""
    assert anchor1.shape == anchor2.shape == img_sentc.shape == sent_imgc.shape
    assert anchor1.ndim == 2, "expecting 2-D score tensors"
    M, N = anchor1.shape

    # Tile sizes: (8,128)-aligned, capped so 4 inputs x 2 pipeline buffers stay
    # well inside every generation's VMEM (<= ~16 MiB at f32 with 512x1024 tiles).
    tm = min(tm_max, _round_up(M, 8))
    tn = min(tn_max, _round_up(N, 128))
    grid_m = pl.cdiv(M, tm)
    grid_n = pl.cdiv(N, tn)
    masked = (M % tm != 0) or (N % tn != 0)

    dtype_bytes = jnp.dtype(anchor1.dtype).itemsize
    cost = pl.CostEstimate(
        flops=10 * M * N,
        transcendentals=0,
        bytes_accessed=4 * M * N * dtype_bytes + grid_m * 8 * 128 * 4,
    )

    in_spec = pl.BlockSpec((tm, tn), lambda i, j: (i, j))

    partials = pl.pallas_call(
        functools.partial(
            _pairwise_ranking_loss_kernel,
            margin=float(margin), m=M, n=N, tm=tm, tn=tn, masked=masked,
        ),
        out_shape=jax.ShapeDtypeStruct((grid_m, 8, 128), jnp.float32),
        grid_spec=pltpu.PrefetchScalarGridSpec(
            num_scalar_prefetch=0,
            grid=(grid_m, grid_n),
            in_specs=[in_spec, in_spec, in_spec, in_spec],
            out_specs=pl.BlockSpec((1, 8, 128), lambda i, j: (i, 0, 0)),
            scratch_shapes=[pltpu.VMEM((8, 128), jnp.float32)],
        ),
        compiler_params=pltpu.CompilerParams(
            dimension_semantics=("parallel", "arbitrary"),
            vmem_limit_bytes=40 * 1024 * 1024,
        ),
        cost_estimate=cost,
    )(anchor1, anchor2, img_sentc, sent_imgc)

    # Each row tile's partial sum is replicated across its (8,128) block; read [0,0].
    return jnp.sum(partials[:, 0, 0])


if __name__ == "__main__":
    margin = 0.2
    key = jax.random.PRNGKey(0)

    def ref_loss(a1, a2, isc, sic):
        return (jnp.sum(jnp.maximum(margin - a1 + isc, 0.0))
                + jnp.sum(jnp.maximum(margin - a2 + sic, 0.0)))

    # Case 1: tile-aligned shapes, single tile.
    k1, k2, k3, k4 = jax.random.split(key, 4)
    shape = (8, 128)
    a1 = jax.random.normal(k1, shape, dtype=jnp.float32)
    a2 = jax.random.normal(k2, shape, dtype=jnp.float32)
    isc = jax.random.normal(k3, shape, dtype=jnp.float32)
    sic = jax.random.normal(k4, shape, dtype=jnp.float32)

    loss = pairwise_ranking_loss(a1, a2, isc, sic, margin)
    loss = jax.block_until_ready(loss)
    ref = ref_loss(a1, a2, isc, sic)
    assert jnp.allclose(loss, ref, rtol=1e-5, atol=1e-5), (loss, ref)

    # Case 2: non-aligned shape with a multi-tile grid (exercises accumulation,
    # per-row-tile partial outputs, and in-kernel edge masking).
    k5, k6, k7, k8 = jax.random.split(jax.random.PRNGKey(0), 4)
    shape2 = (24, 300)
    b1 = jax.random.normal(k5, shape2, dtype=jnp.float32)
    b2 = jax.random.normal(k6, shape2, dtype=jnp.float32)
    bis = jax.random.normal(k7, shape2, dtype=jnp.float32)
    bsi = jax.random.normal(k8, shape2, dtype=jnp.float32)

    loss2 = pairwise_ranking_loss(b1, b2, bis, bsi, margin, tm_max=8, tn_max=128)
    loss2 = jax.block_until_ready(loss2)
    ref2 = ref_loss(b1, b2, bis, bsi)
    assert jnp.allclose(loss2, ref2, rtol=1e-5, atol=1e-5), (loss2, ref2)

    print("KERNEL_OK")
</pallas_src>

<mosaic_0001>
module attributes {stable_mosaic.version = 11 : i64} {
  func.func @_pairwise_ranking_loss_kernel(%arg0: i32, %arg1: i32, %arg2: memref<8x128xf32, #tpu.memory_space<vmem>>, %arg3: memref<8x128xf32, #tpu.memory_space<vmem>>, %arg4: memref<8x128xf32, #tpu.memory_space<vmem>>, %arg5: memref<8x128xf32, #tpu.memory_space<vmem>>, %arg6: memref<1x8x128xf32, #tpu.memory_space<vmem>>, %arg7: memref<8x128xf32, #tpu.memory_space<vmem>>) attributes {dimension_semantics = [#tpu.dimension_semantics<parallel>, #tpu.dimension_semantics<arbitrary>], iteration_bounds = array<i64: 1, 1>, scalar_prefetch = 0 : i64, scratch_operands = 1 : i64, tpu.core_type = #tpu.core_type<tc>, window_params = [{transform_indices = @transform_0, window_bounds = array<i64: 8, 128>}, {transform_indices = @transform_1, window_bounds = array<i64: 8, 128>}, {transform_indices = @transform_2, window_bounds = array<i64: 8, 128>}, {transform_indices = @transform_3, window_bounds = array<i64: 8, 128>}, {transform_indices = @transform_4, window_bounds = array<i64: 1, 8, 128>}]} {
    %c0_i32 = arith.constant 0 : i32
    %0 = arith.cmpi eq, %arg1, %c0_i32 : i32
    %1 = arith.extui %0 : i1 to i32
    %c0_i32_0 = arith.constant 0 : i32
    %2 = arith.cmpi ne, %1, %c0_i32_0 : i32
    scf.if %2 {
      %cst_18 = arith.constant 0.000000e+00 : f32
      %29 = vector.broadcast %cst_18 : f32 to vector<8x128xf32>
      %c0_19 = arith.constant 0 : index
      %c0_20 = arith.constant 0 : index
      %30 = vector.load %arg7[%c0_19, %c0_20] : memref<8x128xf32, #tpu.memory_space<vmem>>, vector<8x128xf32>
      tpu.vector_store %arg7[%c0_19, %c0_20], %29 {strides = array<i32>} : memref<8x128xf32, #tpu.memory_space<vmem>>, vector<8x128xf32>,
    } else {
    }
    %c0 = arith.constant 0 : index
    %c0_1 = arith.constant 0 : index
    %3 = vector.load %arg2[%c0, %c0_1] : memref<8x128xf32, #tpu.memory_space<vmem>>, vector<8x128xf32>
    %c0_2 = arith.constant 0 : index
    %c0_3 = arith.constant 0 : index
    %4 = vector.load %arg3[%c0_2, %c0_3] : memref<8x128xf32, #tpu.memory_space<vmem>>, vector<8x128xf32>
    %c0_4 = arith.constant 0 : index
    %c0_5 = arith.constant 0 : index
    %5 = vector.load %arg4[%c0_4, %c0_5] : memref<8x128xf32, #tpu.memory_space<vmem>>, vector<8x128xf32>
    %c0_6 = arith.constant 0 : index
    %c0_7 = arith.constant 0 : index
    %6 = vector.load %arg5[%c0_6, %c0_7] : memref<8x128xf32, #tpu.memory_space<vmem>>, vector<8x128xf32>
    %cst = arith.constant 2.000000e-01 : f32
    %7 = vector.broadcast %cst : f32 to vector<8x128xf32>
    %8 = arith.subf %7, %3 : vector<8x128xf32>
    %9 = arith.addf %8, %5 : vector<8x128xf32>
    %cst_8 = arith.constant 0.000000e+00 : f32
    %10 = vector.broadcast %cst_8 : f32 to vector<8x128xf32>
    %11 = arith.maximumf %9, %10 : vector<8x128xf32>
    %cst_9 = arith.constant 2.000000e-01 : f32
    %12 = vector.broadcast %cst_9 : f32 to vector<8x128xf32>
    %13 = arith.subf %12, %4 : vector<8x128xf32>
    %14 = arith.addf %13, %6 : vector<8x128xf32>
    %cst_10 = arith.constant 0.000000e+00 : f32
    %15 = vector.broadcast %cst_10 : f32 to vector<8x128xf32>
    %16 = arith.maximumf %14, %15 : vector<8x128xf32>
    %17 = arith.addf %11, %16 : vector<8x128xf32>
    %c0_11 = arith.constant 0 : index
    %c0_12 = arith.constant 0 : index
    %18 = vector.load %arg7[%c0_11, %c0_12] : memref<8x128xf32, #tpu.memory_space<vmem>>, vector<8x128xf32>
    %19 = vector.shape_cast %17 : vector<8x128xf32> to vector<1x8x128xf32>
    %cst_13 = arith.constant dense<0.000000e+00> : vector<1xf32>
    %20 = vector.multi_reduction <add>, %19, %cst_13 [1, 2] : vector<1x8x128xf32> to vector<1xf32>
    %21 = vector.shape_cast %20 : vector<1xf32> to vector<1x1x1xf32>
    %22 = vector.extract %21[0, 0, 0] : f32 from vector<1x1x1xf32>
    %23 = vector.broadcast %22 : f32 to vector<8x128xf32>
    %24 = arith.addf %18, %23 : vector<8x128xf32>
    %c0_14 = arith.constant 0 : index
    %c0_15 = arith.constant 0 : index
    %25 = vector.load %arg7[%c0_14, %c0_15] : memref<8x128xf32, #tpu.memory_space<vmem>>, vector<8x128xf32>
    tpu.vector_store %arg7[%c0_14, %c0_15], %24 {strides = array<i32>} : memref<8x128xf32, #tpu.memory_space<vmem>>, vector<8x128xf32>,
    %c0_i32_16 = arith.constant 0 : i32
    %26 = arith.cmpi eq, %arg1, %c0_i32_16 : i32
    %27 = arith.extui %26 : i1 to i32
    %c0_i32_17 = arith.constant 0 : i32
    %28 = arith.cmpi ne, %27, %c0_i32_17 : i32
    scf.if %28 {
      %c0_18 = arith.constant 0 : index
      %c0_19 = arith.constant 0 : index
      %29 = vector.load %arg7[%c0_18, %c0_19] : memref<8x128xf32, #tpu.memory_space<vmem>>, vector<8x128xf32>
      %c0_20 = arith.constant 0 : index
      %c0_21 = arith.constant 0 : index
      %c0_22 = arith.constant 0 : index
      %30 = vector.load %arg6[%c0_20, %c0_21, %c0_22] : memref<1x8x128xf32, #tpu.memory_space<vmem>>, vector<1x8x128xf32>
      %31 = vector.shape_cast %30 : vector<1x8x128xf32> to vector<8x128xf32>
      %32 = vector.shape_cast %29 : vector<8x128xf32> to vector<1x8x128xf32>
      tpu.vector_store %arg6[%c0_20, %c0_21, %c0_22], %32 {strides = array<i32>} : memref<1x8x128xf32, #tpu.memory_space<vmem>>, vector<1x8x128xf32>,
    } else {
    }
    return
  }
  func.func @transform_0(%arg0: i32, %arg1: i32) -> (i32, i32) {
    %c0_i32 = arith.constant 0 : i32
    return %arg0, %arg1 : i32, i32
  }
  func.func @transform_1(%arg0: i32, %arg1: i32) -> (i32, i32) {
    %c0_i32 = arith.constant 0 : i32
    return %arg0, %arg1 : i32, i32
  }
  func.func @transform_2(%arg0: i32, %arg1: i32) -> (i32, i32) {
    %c0_i32 = arith.constant 0 : i32
    return %arg0, %arg1 : i32, i32
  }
  func.func @transform_3(%arg0: i32, %arg1: i32) -> (i32, i32) {
    %c0_i32 = arith.constant 0 : i32
    return %arg0, %arg1 : i32, i32
  }
  func.func @transform_4(%arg0: i32, %arg1: i32) -> (i32, i32, i32) {
    %c0_i32 = arith.constant 0 : i32
    %c0_i32_0 = arith.constant 0 : i32
    %c0_i32_1 = arith.constant 0 : i32
    return %arg0, %c0_i32, %c0_i32_0 : i32, i32, i32
  }
}

</mosaic_0001>

<llo_original>
// kernel: tpu_custom_call.1
$region0: #{tpu_custom_call.1}
  #allocation0 [shape = 'u32[]', space=smem, size = 0x4, offset = 0x4, fixed_abs, tag = 'smem constant byte address 0x4 - core index']
  #allocation1 [shape = 'u32[144,128]{1,0:T(1,128)}', space=vmem, size = 0x12000, scoped, tag = 'internal scratch']
  #allocation2 [shape = 'f32[8,128]{1,0:T(8,128)}', space=vmem, size = 0x1000, scoped, tag = 'scratch operand']
  %s0 = inlined_call_operand.hbm [shape: f32[8,128], index: 0, kind: input, shape index: {}]
  %s1 = inlined_call_operand.hbm [shape: f32[8,128], index: 1, kind: input, shape index: {}]
  %s2 = inlined_call_operand.hbm [shape: f32[8,128], index: 2, kind: input, shape index: {}]
  %s3 = inlined_call_operand.hbm [shape: f32[8,128], index: 3, kind: input, shape index: {}]
  %s4 = inlined_call_operand.hbm [shape: f32[1,8,128], index: 4, kind: output, shape index: {}]
  %s5 = sld [smem:[#allocation0]]
  $region50: #{tpu_custom_call.1} parent=0
    _
  %s7 = ssub.s32 1, %s5
  %s8 = scalar_select 0, %s7, %s5
  $region1: #{tpu_custom_call.1} parent=0
    #allocation3 [shape = 'u8[4096]{0}', space=vmem, size = 0x1000, scoped, tag = 'input window, operand 0, single buffered']
    #allocation4 [shape = 's32[1]{0}', space=sflag, size = 0x4, scoped, tag = 'scoped memory for tpu_custom_call.1']
    #allocation5 [shape = 's32[1]{0}', space=sflag, size = 0x4, scoped, tag = 'scoped memory for tpu_custom_call.1']
    #allocation6 [shape = 'u8[4096]{0}', space=vmem, size = 0x1000, scoped, tag = 'input window, operand 1, single buffered']
    #allocation7 [shape = 's32[1]{0}', space=sflag, size = 0x4, scoped, tag = 'scoped memory for tpu_custom_call.1']
    #allocation8 [shape = 'u8[4096]{0}', space=vmem, size = 0x1000, scoped, tag = 'input window, operand 2, single buffered']
    #allocation9 [shape = 'u8[4096]{0}', space=vmem, size = 0x1000, scoped, tag = 'input window, operand 3, single buffered']
    #allocation10 [shape = 's32[1]{0}', space=sflag, size = 0x4, scoped, tag = 'scoped memory for tpu_custom_call.1']
    #allocation11 [shape = 'u8[4096]{0}', space=vmem, size = 0x1000, scoped, tag = 'output window, operand 0, single buffered']
    %9 = vsyncpa [#allocation4], 0
    %10 = vsyncpa [#allocation7], 0
    %11 = vsyncpa [#allocation10], 0
    %12 = vsyncpa [#allocation5], 0
    // Predicated region
    $region2: #{tpu_custom_call.1} parent=1 // pred_check
      _
    $region3: #{tpu_custom_call.1} parent=1 // pred_check_branch
      %14 = sbr.rel (0) target = $region5
    $region4: #{tpu_custom_call.1} parent=1 // pred_region
      %s16 = ssub.s32 128, 128
      %17 = vsyncadd [#allocation4], %s16
      %s19 = sshll.u32 [#allocation3], 4
      %s20 = int_to_ptr.vmem [resolvable:$true] %s19
      %22 = dma.hbm_to_vmem [thread:$0]  %s0, 128, %s20, [#allocation4]
    $region5: #{tpu_custom_call.1} parent=1 // pred_fallthru
      _
    // Predicated region
    $region6: #{tpu_custom_call.1} parent=1 // pred_check
      _
    $region7: #{tpu_custom_call.1} parent=1 // pred_check_branch
      %24 = sbr.rel (0) target = $region9
    $region8: #{tpu_custom_call.1} parent=1 // pred_region
      %s26 = ssub.s32 128, 128
      %27 = vsyncadd [#allocation7], %s26
      %s29 = sshll.u32 [#allocation6], 4
      %s30 = int_to_ptr.vmem [resolvable:$true] %s29
      %32 = dma.hbm_to_vmem [thread:$0]  %s1, 128, %s30, [#allocation7]
    $region9: #{tpu_custom_call.1} parent=1 // pred_fallthru
      _
    // Predicated region
    $region10: #{tpu_custom_call.1} parent=1 // pred_check
      _
    $region11: #{tpu_custom_call.1} parent=1 // pred_check_branch
      %34 = sbr.rel (0) target = $region13
    $region12: #{tpu_custom_call.1} parent=1 // pred_region
      %s36 = ssub.s32 128, 128
      %37 = vsyncadd [#allocation7], %s36
      %s39 = sshll.u32 [#allocation8], 4
      %s40 = int_to_ptr.vmem [resolvable:$true] %s39
      %42 = dma.hbm_to_vmem [thread:$0]  %s2, 128, %s40, [#allocation7]
    $region13: #{tpu_custom_call.1} parent=1 // pred_fallthru
      _
    // Predicated region
    $region14: #{tpu_custom_call.1} parent=1 // pred_check
      _
    $region15: #{tpu_custom_call.1} parent=1 // pred_check_branch
      %44 = sbr.rel (0) target = $region17
    $region16: #{tpu_custom_call.1} parent=1 // pred_region
      %s46 = ssub.s32 128, 128
      %47 = vsyncadd [#allocation10], %s46
      %s49 = sshll.u32 [#allocation9], 4
      %s50 = int_to_ptr.vmem [resolvable:$true] %s49
      %52 = dma.hbm_to_vmem [thread:$0]  %s3, 128, %s50, [#allocation10]
    $region17: #{tpu_custom_call.1} parent=1 // pred_fallthru
      _
    // Predicated region
    $region18: #{tpu_custom_call.1} parent=1 // pred_check
      _
    $region19: #{tpu_custom_call.1} parent=1 // pred_check_branch
      %54 = sbr.rel (0) target = $region21
    $region20: #{tpu_custom_call.1} parent=1 // pred_region
      %55 = dma.done [#allocation4], 128
    $region21: #{tpu_custom_call.1} parent=1 // pred_fallthru
      _
    // Predicated region
    $region22: #{tpu_custom_call.1} parent=1 // pred_check
      _
    $region23: #{tpu_custom_call.1} parent=1 // pred_check_branch
      %57 = sbr.rel (0) target = $region25
    $region24: #{tpu_custom_call.1} parent=1 // pred_region
      %58 = dma.done [#allocation7], 128
    $region25: #{tpu_custom_call.1} parent=1 // pred_fallthru
      _
    // Predicated region
    $region26: #{tpu_custom_call.1} parent=1 // pred_check
      _
    $region27: #{tpu_custom_call.1} parent=1 // pred_check_branch
      %60 = sbr.rel (0) target = $region29
    $region28: #{tpu_custom_call.1} parent=1 // pred_region
      %61 = dma.done [#allocation7], 128
    $region29: #{tpu_custom_call.1} parent=1 // pred_fallthru
      _
    // Predicated region
    $region30: #{tpu_custom_call.1} parent=1 // pred_check
      _
    $region31: #{tpu_custom_call.1} parent=1 // pred_check_branch
      %63 = sbr.rel (0) target = $region33
    $region32: #{tpu_custom_call.1} parent=1 // pred_region
      %64 = dma.done [#allocation10], 128
    $region33: #{tpu_custom_call.1} parent=1 // pred_fallthru
      _
    %p65 = scmp.eq.s32.totalorder 0, 0
    // Predicated region
    $region34: #{tpu_custom_call.1} parent=1 // pred_check
      %p66 = pneg %p65
    $region35: #{tpu_custom_call.1} parent=1 // pred_check_branch
      %68 = sbr.rel (%p66) target = $region37
    $region36: #{tpu_custom_call.1} parent=1 // pred_region
      %69 = vst [vmem:[#allocation2] sm:$0xff] 0.0
    $region37: #{tpu_custom_call.1} parent=1 // pred_fallthru
      _
    %v70 = vld [vmem:[#allocation3] sm:$0xff]
    %v71 = vld [vmem:[#allocation6] sm:$0xff]
    %v72 = vld [vmem:[#allocation8] sm:$0xff]
    %v73 = vld [vmem:[#allocation9] sm:$0xff]
    %v74 = vsub.f32 0.2, %v70
    %v75 = vadd.f32 %v74, %v72
    %v76 = vmax.f32 %v75, 0.0
    %v77 = vsub.f32 0.2, %v71
    %v78 = vadd.f32 %v77, %v73
    %v79 = vmax.f32 %v78, 0.0
    %v80 = vadd.f32 %v76, %v79
    %v81 = vld [vmem:[#allocation2] sm:$0xff]
    %82 = vadd.xlane.f32.xlu0 %v80
    %v83 = vpop.xlane.xlu0 %82
    %v84 = vrot.slane %v83, 4
    %v85 = vadd.f32 %v83, %v84
    %v86 = vrot.slane %v85, 2
    %v87 = vadd.f32 %v85, %v86
    %v88 = vrot.slane %v87, 1
    %v89 = vadd.f32 %v87, %v88
    %s90 = vtos %v89
    %v91 = vstv %s90
    %v92 = vadd.f32 %v81, %v91
    %93 = vst [vmem:[#allocation2] sm:$0xff] %v92
    // Predicated region
    $region38: #{tpu_custom_call.1} parent=1 // pred_check
      %p94 = pneg %p65
    $region39: #{tpu_custom_call.1} parent=1 // pred_check_branch
      %96 = sbr.rel (%p94) target = $region41
    $region40: #{tpu_custom_call.1} parent=1 // pred_region
      %v97 = vld [vmem:[#allocation2] sm:$0xff]
      %98 = vst [vmem:[#allocation11] sm:$0xff] %v97
    $region41: #{tpu_custom_call.1} parent=1 // pred_fallthru
      _
    // Predicated region
    $region42: #{tpu_custom_call.1} parent=1 // pred_check
      _
    $region43: #{tpu_custom_call.1} parent=1 // pred_check_branch
      %100 = sbr.rel (0) target = $region45
    $region44: #{tpu_custom_call.1} parent=1 // pred_region
      %s102 = ssub.s32 128, 128
      %103 = vsyncadd [#allocation5], %s102
      %s105 = sshll.u32 [#allocation11], 4
      %s106 = int_to_ptr.vmem [resolvable:$true] %s105
      %108 = dma.vmem_to_hbm [thread:$0]  %s106, 128, %s4, [#allocation5]
    $region45: #{tpu_custom_call.1} parent=1 // pred_fallthru
      _
    // Predicated region
    $region46: #{tpu_custom_call.1} parent=1 // pred_check
      _
    $region47: #{tpu_custom_call.1} parent=1 // pred_check_branch
      %110 = sbr.rel (0) target = $region49
    $region48: #{tpu_custom_call.1} parent=1 // pred_region
      %111 = dma.done [#allocation5], 128
    $region49: #{tpu_custom_call.1} parent=1 // pred_fallthru
      _
    %112 = vsyncpa [#allocation4], 1
    %113 = vsyncpa [#allocation7], 1
    %114 = vsyncpa [#allocation10], 1
    %115 = vsyncpa [#allocation5], 1

</llo_original>
